<compile_context>
chip_gen: v5e
topology: v5e:2x2
jax: 0.10.0
libtpu: 0.0.40
codegen_flags: <defaults>
</compile_context>

<pallas_src>
import functools

import jax
import jax.numpy as jnp
from jax.experimental import pallas as pl
from jax.experimental.pallas import tpu as pltpu


def _round_up(x, m):
    return ((x + m - 1) // m) * m


def _cdiv(a, b):
    return -(-a // b)


def _pick_tile(dim, target, align):
    """Pick a tile ~= target that evenly divides a minimally padded dim.

    Returns (tile, padded_dim, n_blocks) with tile % align == 0 and
    padded_dim = tile * n_blocks >= dim.  Rebalances the tile instead of
    rounding the dim up to a tile multiple (avoids padding blow-up).
    """
    dim_a = _round_up(dim, align)
    target = max(align, min(target, dim_a))
    n_blocks = _cdiv(dim_a, target)
    tile = _round_up(_cdiv(dim_a, n_blocks), align)
    return tile, tile * n_blocks, n_blocks


def _apply_activation(y, activate):
    if activate == "relu":
        return jnp.maximum(y, 0.0)
    if activate == "sigmoid":
        return jax.nn.sigmoid(y)
    if activate == "tanh":
        return jnp.tanh(y)
    return y


def _fcnet_kernel_fused(x_ref, w_ref, b_ref, o_ref, *, activate):
    # Single K pass: full contraction + fused bias/activation, no accumulator.
    # x_ref: (tb, K) ; w_ref: (K, tn) ; b_ref: (1, tn) f32 ; o_ref: (tb, tn)
    y = jax.lax.dot_general(
        x_ref[...], w_ref[...],
        dimension_numbers=(((1,), (0,)), ((), ())),
        preferred_element_type=jnp.float32)
    y = y + b_ref[...]
    o_ref[...] = _apply_activation(y, activate).astype(o_ref.dtype)


def _fcnet_kernel_acc(x_ref, w_ref, b_ref, o_ref, acc_ref, *, activate):
    # Multi K-step path: direct write at k==0 (no zero-init pass), accumulate
    # on later steps, fused epilogue on the last step.
    k = pl.program_id(2)
    part = jax.lax.dot_general(
        x_ref[...], w_ref[...],
        dimension_numbers=(((1,), (0,)), ((), ())),
        preferred_element_type=jnp.float32)

    @pl.when(k == 0)
    def _():
        acc_ref[...] = part

    @pl.when(k != 0)
    def _():
        acc_ref[...] += part

    @pl.when(k == pl.num_programs(2) - 1)
    def _():
        y = acc_ref[...] + b_ref[...]
        o_ref[...] = _apply_activation(y, activate).astype(o_ref.dtype)


def fcnet_forward(x, v, g, b, *, activate=None, drop=0.0,
                  tb=512, tn=1024, tk=None,
                  matmul_dtype=jnp.bfloat16, out_dtype=None,
                  vmem_budget_bytes=40 * 1024 * 1024):
    """Pallas implementation of FCNet.forward (eval mode).

    x: (B, in_size)            input
    v: (out_size, in_size)     weight_norm 'v' parameter (PyTorch Linear layout)
    g: scalar                  weight_norm 'g' parameter (dim=None)
    b: (out_size,)             bias
    """
    # TODO(synk): dropout (drop > 0, training mode) not implemented; eval-mode
    # / drop=0 identity semantics are reproduced here.
    del drop

    activate = activate.lower() if activate is not None else None
    if activate not in (None, "relu", "sigmoid", "tanh"):
        raise ValueError(f"unsupported activation: {activate}")

    B, in_size = x.shape
    out_size, in_size_w = v.shape
    assert in_size == in_size_w
    out_dtype = x.dtype if out_dtype is None else jnp.dtype(out_dtype)

    mm_itemsize = jnp.dtype(matmul_dtype).itemsize
    out_itemsize = jnp.dtype(out_dtype).itemsize
    row_align = 8 * max(1, 4 // mm_itemsize)          # 8 for f32, 16 for bf16

    # ---- weight prep (fold weight_norm scalar scale, pre-transpose to (K,N)) ----
    # weight_norm(dim=None): W = g * V / ||V||_F  (single scalar scale).
    # NOTE: for static weights this block (scale + cast + transpose + pad) can
    # be hoisted out of the per-call hot path and computed once.
    v32 = v.astype(jnp.float32)
    scale = jnp.asarray(g, jnp.float32).reshape(()) / jnp.sqrt(jnp.sum(v32 * v32))
    w_t = (v32.T * scale).astype(matmul_dtype)        # (in_size, out_size)
    bias = b.reshape(1, out_size).astype(jnp.float32)

    # ---- tile selection: minimal padding, rebalanced tiles ----
    tb, m_pad, mb = _pick_tile(B, tb, row_align)
    tn, n_pad, nb = _pick_tile(out_size, tn, 128)

    # v7x megacore: if the parallel grid collapsed to a single block on a
    # non-tiny problem, split one parallel axis so both TensorCores get work.
    if mb * nb == 1:
        if n_pad >= 256:
            tn, n_pad, nb = _pick_tile(out_size, _round_up(_cdiv(n_pad, 2), 128), 128)
        elif m_pad >= 2 * row_align and m_pad * n_pad >= 128 * 256:
            tb, m_pad, mb = _pick_tile(B, _round_up(_cdiv(m_pad, 2), row_align),
                                       row_align)

    # K tile: use the full (padded) K when the double-buffered tiles fit the
    # VMEM budget (-> single pass, no accumulator); otherwise the largest
    # 128-multiple that fits.
    k_pad_min = _round_up(in_size, 128)
    fixed_bytes = 2 * tb * tn * out_itemsize + 2 * tn * 4
    per_k_bytes = 2 * (tb + tn) * mm_itemsize         # x + w tiles, double buffered
    if tk is None:
        tk = max(128, (vmem_budget_bytes - fixed_bytes) // per_k_bytes)
    if tk >= k_pad_min:
        tk, k_pad, kb = k_pad_min, k_pad_min, 1
    else:
        tk_fit = (vmem_budget_bytes - fixed_bytes - tb * tn * 4) // per_k_bytes
        tk = max(128, min(tk, tk_fit))
        tk, k_pad, kb = _pick_tile(in_size, tk, 128)

    # ---- pad operands (zero-pad K is exact; padded rows/cols sliced off) ----
    xm = x.astype(matmul_dtype)
    if (m_pad, k_pad) != (B, in_size):
        xm = jnp.pad(xm, ((0, m_pad - B), (0, k_pad - in_size)))
    wm = w_t
    if (k_pad, n_pad) != (in_size, out_size):
        wm = jnp.pad(wm, ((0, k_pad - in_size), (0, n_pad - out_size)))
    if n_pad != out_size:
        bias = jnp.pad(bias, ((0, 0), (0, n_pad - out_size)))

    grid = (mb, nb, kb)

    if kb == 1:
        kernel = functools.partial(_fcnet_kernel_fused, activate=activate)
        scratch = []
        acc_bytes = 0
    else:
        kernel = functools.partial(_fcnet_kernel_acc, activate=activate)
        scratch = [pltpu.VMEM((tb, tn), jnp.float32)]
        acc_bytes = tb * tn * 4

    # VMEM limit from actual tile footprint; capped at 48 MiB (safe on v7x's
    # 64 MiB/TC, well within v5e/v6e's 128 MiB).
    footprint = (2 * tb * tk * mm_itemsize
                 + 2 * tk * tn * mm_itemsize
                 + 2 * tn * 4
                 + 2 * tb * tn * out_itemsize
                 + acc_bytes)
    vmem_limit = int(min(max(footprint + (8 << 20), 32 << 20), 48 << 20))

    cost = pl.CostEstimate(
        flops=2 * m_pad * k_pad * n_pad,
        transcendentals=(m_pad * n_pad if activate in ("sigmoid", "tanh") else 0),
        bytes_accessed=int(nb * m_pad * k_pad * mm_itemsize   # x re-read per N block
                           + mb * k_pad * n_pad * mm_itemsize  # w re-read per M block
                           + n_pad * 4
                           + m_pad * n_pad * out_itemsize),
    )

    out = pl.pallas_call(
        kernel,
        out_shape=jax.ShapeDtypeStruct((m_pad, n_pad), out_dtype),
        grid_spec=pltpu.PrefetchScalarGridSpec(
            num_scalar_prefetch=0,
            grid=grid,
            in_specs=[
                pl.BlockSpec((tb, tk), lambda i, j, k: (i, k)),   # x tile
                pl.BlockSpec((tk, tn), lambda i, j, k: (k, j)),   # weight tile (K,N)
                pl.BlockSpec((1, tn), lambda i, j, k: (0, j)),    # bias tile
            ],
            out_specs=pl.BlockSpec((tb, tn), lambda i, j, k: (i, j)),
            scratch_shapes=scratch,
        ),
        compiler_params=pltpu.CompilerParams(
            dimension_semantics=("parallel", "parallel", "arbitrary"),
            vmem_limit_bytes=vmem_limit),
        cost_estimate=cost,
    )(xm, wm, bias)

    if (m_pad, n_pad) != (B, out_size):
        out = out[:B, :out_size]
    return out


def _reference(x, v, g, b, activate):
    w_eff = g * v / jnp.sqrt(jnp.sum(v.astype(jnp.float32) ** 2))
    y = x @ w_eff.T + b
    return _apply_activation(y, activate)


if __name__ == "__main__":
    key = jax.random.PRNGKey(0)

    def make_case(key, batch, in_size, out_size):
        k_x, k_v, k_g, k_b = jax.random.split(key, 4)
        x = jax.random.normal(k_x, (batch, in_size), dtype=jnp.float32)
        v = jax.random.normal(k_v, (out_size, in_size), dtype=jnp.float32) * 0.1
        g = jax.random.uniform(k_g, (), dtype=jnp.float32) + 0.5
        b = jax.random.normal(k_b, (out_size,), dtype=jnp.float32) * 0.1
        return x, v, g, b

    cases = [
        # (batch, in, out, activation, extra kwargs)
        (16, 32, 32, "relu", {}),             # aligned-ish small case, fused K path
        (10, 70, 33, "tanh", {}),             # awkward shapes -> padding/rebalance
        (16, 256, 64, None, {"tk": 128}),     # forces multi-K accumulator path
    ]

    keys = jax.random.split(key, len(cases))
    for case_key, (batch, in_size, out_size, act, kw) in zip(keys, cases):
        x, v, g, b = make_case(case_key, batch, in_size, out_size)
        out = fcnet_forward(x, v, g, b, activate=act, drop=0.0, **kw)
        out = jax.block_until_ready(out)
        ref = _reference(x, v, g, b, act)
        assert out.shape == ref.shape, (out.shape, ref.shape)
        assert jnp.allclose(out, ref, atol=2e-2, rtol=2e-2), (
            f"mismatch for case {(batch, in_size, out_size, act)}")

    print("KERNEL_OK")
</pallas_src>

<mosaic_0001>
module attributes {stable_mosaic.version = 11 : i64} {
  func.func @_fcnet_kernel_fused(%arg0: i32, %arg1: i32, %arg2: i32, %arg3: memref<16x128xbf16, #tpu.memory_space<vmem>>, %arg4: memref<128x128xbf16, #tpu.memory_space<vmem>>, %arg5: memref<1x128xf32, #tpu.memory_space<vmem>>, %arg6: memref<16x128xf32, #tpu.memory_space<vmem>>) attributes {dimension_semantics = [#tpu.dimension_semantics<parallel>, #tpu.dimension_semantics<parallel>, #tpu.dimension_semantics<arbitrary>], iteration_bounds = array<i64: 1, 1, 1>, scalar_prefetch = 0 : i64, scratch_operands = 0 : i64, tpu.core_type = #tpu.core_type<tc>, window_params = [{transform_indices = @transform_0, window_bounds = array<i64: 16, 128>}, {transform_indices = @transform_1, window_bounds = array<i64: 128, 128>}, {transform_indices = @transform_2, window_bounds = array<i64: 1, 128>}, {transform_indices = @transform_3, window_bounds = array<i64: 16, 128>}]} {
    %c0 = arith.constant 0 : index
    %c0_0 = arith.constant 0 : index
    %0 = vector.load %arg3[%c0, %c0_0] : memref<16x128xbf16, #tpu.memory_space<vmem>>, vector<16x128xbf16>
    %c0_1 = arith.constant 0 : index
    %c0_2 = arith.constant 0 : index
    %1 = vector.load %arg4[%c0_1, %c0_2] : memref<128x128xbf16, #tpu.memory_space<vmem>>, vector<128x128xbf16>
    %cst = arith.constant dense<0.000000e+00> : vector<16x128xf32>
    %2 = tpu.matmul %0, %1, %cst {dimension_numbers = #tpu.dot_dimension_numbers<[1], [0], [0], [1], [0, 0, 1, 1], [], []>} : vector<16x128xbf16>, vector<128x128xbf16>, vector<16x128xf32> -> vector<16x128xf32>
    %c0_3 = arith.constant 0 : index
    %c0_4 = arith.constant 0 : index
    %3 = vector.load %arg5[%c0_3, %c0_4] : memref<1x128xf32, #tpu.memory_space<vmem>>, vector<1x128xf32>
    %4 = vector.broadcast %3 : vector<1x128xf32> to vector<16x128xf32>
    %5 = arith.addf %2, %4 : vector<16x128xf32>
    %cst_5 = arith.constant 0.000000e+00 : f32
    %6 = vector.broadcast %cst_5 : f32 to vector<16x128xf32>
    %7 = arith.maximumf %5, %6 : vector<16x128xf32>
    %c0_6 = arith.constant 0 : index
    %c0_7 = arith.constant 0 : index
    %8 = vector.load %arg6[%c0_6, %c0_7] : memref<16x128xf32, #tpu.memory_space<vmem>>, vector<16x128xf32>
    tpu.vector_store %arg6[%c0_6, %c0_7], %7 {strides = array<i32>} : memref<16x128xf32, #tpu.memory_space<vmem>>, vector<16x128xf32>,
    return
  }
  func.func @transform_0(%arg0: i32, %arg1: i32, %arg2: i32) -> (i32, i32) {
    %c0_i32 = arith.constant 0 : i32
    return %arg0, %arg2 : i32, i32
  }
  func.func @transform_1(%arg0: i32, %arg1: i32, %arg2: i32) -> (i32, i32) {
    %c0_i32 = arith.constant 0 : i32
    return %arg2, %arg1 : i32, i32
  }
  func.func @transform_2(%arg0: i32, %arg1: i32, %arg2: i32) -> (i32, i32) {
    %c0_i32 = arith.constant 0 : i32
    %c0_i32_0 = arith.constant 0 : i32
    return %c0_i32, %arg1 : i32, i32
  }
  func.func @transform_3(%arg0: i32, %arg1: i32, %arg2: i32) -> (i32, i32) {
    %c0_i32 = arith.constant 0 : i32
    return %arg0, %arg1 : i32, i32
  }
}

</mosaic_0001>

<llo_original>
// kernel: tpu_custom_call.1
$region0: #{tpu_custom_call.1}
  #allocation0 [shape = 'u32[]', space=smem, size = 0x4, offset = 0x4, fixed_abs, tag = 'smem constant byte address 0x4 - core index']
  #allocation1 [shape = 'u32[72,128]{1,0:T(1,128)}', space=vmem, size = 0x9000, scoped, tag = 'internal scratch']
  %s0 = inlined_call_operand.hbm [shape: bf16[16,128], index: 0, kind: input, shape index: {}]
  %s1 = inlined_call_operand.hbm [shape: bf16[128,128], index: 1, kind: input, shape index: {}]
  %s2 = inlined_call_operand.vmem [shape: f32[1,128], index: 2, kind: input, shape index: {}]
  %s3 = inlined_call_operand.hbm [shape: f32[16,128], index: 3, kind: output, shape index: {}]
  %s4 = sld [smem:[#allocation0]]
  $region30: #{tpu_custom_call.1} parent=0
    _
  %s6 = ssub.s32 1, %s4
  %s7 = scalar_select 0, %s6, %s4
  $region1: #{tpu_custom_call.1} parent=0
    #allocation2 [shape = 'u8[4096]{0}', space=vmem, size = 0x1000, scoped, tag = 'input window, operand 0, single buffered']
    #allocation3 [shape = 's32[1]{0}', space=sflag, size = 0x4, scoped, tag = 'scoped memory for tpu_custom_call.1']
    #allocation4 [shape = 's32[1]{0}', space=sflag, size = 0x4, scoped, tag = 'scoped memory for tpu_custom_call.1']
    #allocation5 [shape = 'u8[32768]{0}', space=vmem, size = 0x8000, scoped, tag = 'input window, operand 1, single buffered']
    #allocation6 [shape = 's32[1]{0}', space=sflag, size = 0x4, scoped, tag = 'scoped memory for tpu_custom_call.1']
    #allocation7 [shape = 'u8[8192]{0}', space=vmem, size = 0x2000, scoped, tag = 'output window, operand 0, single buffered']
    %8 = vsyncpa [#allocation3], 0
    %9 = vsyncpa [#allocation6], 0
    %10 = vsyncpa [#allocation4], 0
    // Predicated region
    $region2: #{tpu_custom_call.1} parent=1 // pred_check
      _
    $region3: #{tpu_custom_call.1} parent=1 // pred_check_branch
      %12 = sbr.rel (0) target = $region5
    $region4: #{tpu_custom_call.1} parent=1 // pred_region
      %14 = vsyncadd [#allocation3], 0
      %s15 = sshll.u32 %s0, 4
      %s16 = int_to_ptr.hbm [resolvable:$true] %s15
      %s17 = sshll.u32 [#allocation2], 4
      %s18 = int_to_ptr.vmem [resolvable:$true] %s17
      %23 = dma.hbm_to_vmem [thread:$0]  %s16, 128, %s18, [#allocation3], 64, 64, 4
    $region5: #{tpu_custom_call.1} parent=1 // pred_fallthru
      _
    // Predicated region
    $region6: #{tpu_custom_call.1} parent=1 // pred_check
      _
    $region7: #{tpu_custom_call.1} parent=1 // pred_check_branch
      %25 = sbr.rel (0) target = $region9
    $region8: #{tpu_custom_call.1} parent=1 // pred_region
      %27 = vsyncadd [#allocation6], 0
      %s28 = sshll.u32 %s1, 4
      %s29 = int_to_ptr.hbm [resolvable:$true] %s28
      %s30 = sshll.u32 [#allocation5], 4
      %s31 = int_to_ptr.vmem [resolvable:$true] %s30
      %36 = dma.hbm_to_vmem [thread:$0]  %s29, 1024, %s31, [#allocation6], 64, 64, 4
    $region9: #{tpu_custom_call.1} parent=1 // pred_fallthru
      _
    // Predicated region
    $region10: #{tpu_custom_call.1} parent=1 // pred_check
      _
    $region11: #{tpu_custom_call.1} parent=1 // pred_check_branch
      %38 = sbr.rel (0) target = $region13
    $region12: #{tpu_custom_call.1} parent=1 // pred_region
      _
    $region13: #{tpu_custom_call.1} parent=1 // pred_fallthru
      _
    // Predicated region
    $region14: #{tpu_custom_call.1} parent=1 // pred_check
      _
    $region15: #{tpu_custom_call.1} parent=1 // pred_check_branch
      %40 = sbr.rel (0) target = $region17
    $region16: #{tpu_custom_call.1} parent=1 // pred_region
      %42 = dma.done [#allocation3], 128
    $region17: #{tpu_custom_call.1} parent=1 // pred_fallthru
      _
    // Predicated region
    $region18: #{tpu_custom_call.1} parent=1 // pred_check
      _
    $region19: #{tpu_custom_call.1} parent=1 // pred_check_branch
      %44 = sbr.rel (0) target = $region21
    $region20: #{tpu_custom_call.1} parent=1 // pred_region
      %46 = dma.done [#allocation6], 1024
    $region21: #{tpu_custom_call.1} parent=1 // pred_fallthru
      _
    %v47 = vld [vmem:[#allocation2] sm:$0xf]
    %v48 = vld [vmem:[#allocation2 + $0x4] sm:$0xf]
    %v49 = vld [vmem:[#allocation5] sm:$0xf]
    %v50 = vld [vmem:[#allocation5 + $0x4] sm:$0xf]
    %v51 = vld [vmem:[#allocation5 + $0x8] sm:$0xf]
    %v52 = vld [vmem:[#allocation5 + $0xc] sm:$0xf]
    %v53 = vld [vmem:[#allocation5 + $0x10] sm:$0xf]
    %v54 = vld [vmem:[#allocation5 + $0x14] sm:$0xf]
    %v55 = vld [vmem:[#allocation5 + $0x18] sm:$0xf]
    %v56 = vld [vmem:[#allocation5 + $0x1c] sm:$0xf]
    %v57 = vld [vmem:[#allocation5 + $0x20] sm:$0xf]
    %v58 = vld [vmem:[#allocation5 + $0x24] sm:$0xf]
    %v59 = vld [vmem:[#allocation5 + $0x28] sm:$0xf]
    %v60 = vld [vmem:[#allocation5 + $0x2c] sm:$0xf]
    %v61 = vld [vmem:[#allocation5 + $0x30] sm:$0xf]
    %v62 = vld [vmem:[#allocation5 + $0x34] sm:$0xf]
    %v63 = vld [vmem:[#allocation5 + $0x38] sm:$0xf]
    %v64 = vld [vmem:[#allocation5 + $0x3c] sm:$0xf]
    %v65 = vld [vmem:[%s2] sm:$0x1]
    %v67 = vperm.slane %v65, 0
    %v71 = vunpack.c.l.b16 %v47
    %v72 = vunpack.c.l.b16 %v48
    %v73 = vpack.c.b16 %v72, %v71
    %v91 = vunpack.c.l.b16 %v49
    %v92 = vunpack.c.l.b16 %v50
    %v93 = vunpack.c.l.b16 %v51
    %v94 = vunpack.c.l.b16 %v52
    %v95 = vunpack.c.l.b16 %v53
    %v96 = vunpack.c.l.b16 %v54
    %v97 = vunpack.c.l.b16 %v55
    %v98 = vunpack.c.l.b16 %v56
    %v99 = vunpack.c.l.b16 %v57
    %v100 = vunpack.c.l.b16 %v58
    %v101 = vunpack.c.l.b16 %v59
    %v102 = vunpack.c.l.b16 %v60
    %v103 = vunpack.c.l.b16 %v61
    %v104 = vunpack.c.l.b16 %v62
    %v105 = vunpack.c.l.b16 %v63
    %v106 = vunpack.c.l.b16 %v64
    %v107 = vpack.c.b16 %v92, %v91
    %v108 = vpack.c.b16 %v94, %v93
    %v109 = vpack.c.b16 %v96, %v95
    %v110 = vpack.c.b16 %v98, %v97
    %v111 = vpack.c.b16 %v100, %v99
    %v112 = vpack.c.b16 %v102, %v101
    %v113 = vpack.c.b16 %v104, %v103
    %v114 = vpack.c.b16 %v106, %v105
    %123 = vmatpush.bf16.msra.mxu0 %v114
    %124 = vmatpush.bf16.msra.mxu0 %v113
    %125 = vmatpush.bf16.msra.mxu0 %v112
    %126 = vmatpush.bf16.msra.mxu0 %v111
    %127 = vmatpush.bf16.msra.mxu0 %v110
    %128 = vmatpush.bf16.msra.mxu0 %v109
    %129 = vmatpush.bf16.msra.mxu0 %v108
    %130 = vmatpush.bf16.msra.mxu0 %v107
    %131 = vmatmul.bf16.gmra.mxu0 %v73
    %v132 = vpop.f32.mrf.mxu0
    %v133 = vadd.f32 %v67, %v132
    %v134 = vpop.f32.mrf.mxu0
    %v135 = vadd.f32 %v67, %v134
    %136 = vdwg.mxu0
    %v137 = vmax.f32 %v133, 0.0
    %v138 = vmax.f32 %v135, 0.0
    %139 = vst [vmem:[#allocation7] sm:$0xff] %v137
    %140 = vst [vmem:[#allocation7 + $0x8] sm:$0xff] %v138
    // Predicated region
    $region22: #{tpu_custom_call.1} parent=1 // pred_check
      _
    $region23: #{tpu_custom_call.1} parent=1 // pred_check_branch
      %142 = sbr.rel (0) target = $region25
    $region24: #{tpu_custom_call.1} parent=1 // pred_region
      %144 = vsyncadd [#allocation4], 0
      %s145 = sshll.u32 [#allocation7], 4
      %s146 = int_to_ptr.vmem [resolvable:$true] %s145
      %s147 = sshll.u32 %s3, 4
      %s148 = int_to_ptr.hbm [resolvable:$true] %s147
      %153 = dma.vmem_to_hbm [thread:$0]  %s146, 256, %s148, [#allocation4], 128, 128, 8
    $region25: #{tpu_custom_call.1} parent=1 // pred_fallthru
      _
    // Predicated region
    $region26: #{tpu_custom_call.1} parent=1 // pred_check
      _
    $region27: #{tpu_custom_call.1} parent=1 // pred_check_branch
      %155 = sbr.rel (0) target = $region29
    $region28: #{tpu_custom_call.1} parent=1 // pred_region
      %157 = dma.done [#allocation4], 256
    $region29: #{tpu_custom_call.1} parent=1 // pred_fallthru
      _
    %158 = vsyncpa [#allocation3], 1
    %159 = vsyncpa [#allocation6], 1
    %160 = vsyncpa [#allocation4], 1

</llo_original>
